<compile_context>
chip_gen: v7x
topology: tpu7x:2x2x1
jax: 0.10.0
libtpu: 0.0.40
codegen_flags: <defaults>
</compile_context>

<pallas_src>
import jax
import jax.numpy as jnp
from jax.experimental import pallas as pl
from jax.experimental.pallas import tpu as pltpu


def _ratio_kernel(theta_ref, x_ref, w1_ref, b1_ref,
                  w2mu_ref, b2mu_ref, w2ls_ref, b2ls_ref, out_ref):
    # One batch tile per grid step. MLP matmuls hit the MXU; the Gaussian log-prob is VPU/EUP
    # elementwise plus a single XLU lane reduction; the result is stored lane-dense.
    theta = theta_ref[...].astype(jnp.float32)                       # (TB, D)
    x = x_ref[...]                                                    # (TB, Dx) — MXU handles dtype

    h = jnp.tanh(
        jnp.dot(x, w1_ref[...], preferred_element_type=jnp.float32) + b1_ref[...]
    )                                                                 # (TB, H)
    mu = jnp.dot(h, w2mu_ref[...], preferred_element_type=jnp.float32) + b2mu_ref[...]
    log_sigma = jnp.dot(h, w2ls_ref[...], preferred_element_type=jnp.float32) + b2ls_ref[...]

    z = (theta - mu) * jnp.exp(-log_sigma)
    # log q(theta|x) - log p(theta); the two -0.5*log(2*pi) sums cancel exactly.
    ratio = jnp.sum(0.5 * theta * theta - 0.5 * z * z - log_sigma, axis=-1)   # (TB,)
    # Lane-dense store: one (1, 1, TB) block per grid step (no 1-lane masked stores).
    out_ref[...] = ratio.reshape(1, 1, -1).astype(out_ref.dtype)


def _round_up(v, m):
    return ((v + m - 1) // m) * m


def _chip_limits():
    """Return (physical vmem bytes, treat-as-dual-TensorCore) with a conservative fallback."""
    vmem = 64 << 20   # conservative (v7x-class) default if the query is unavailable
    try:
        info = pltpu.get_tpu_info()
        vmem = int(getattr(info, "vmem_capacity_bytes", vmem))
    except Exception:
        pass
    # v7x-class: 64 MiB VMEM per TensorCore and 2 TCs/chip; v5e/v6e: 128 MiB, single TC.
    dual_tc = vmem <= (64 << 20)
    return vmem, dual_tc


def _choose_batch_tile(batch, vmem_bytes, dual_tc):
    """Big multiple-of-8 batch tile; only force >=2 grid steps on dual-TensorCore chips."""
    cap = 2048 if vmem_bytes <= (64 << 20) else 8192
    tb = min(cap, _round_up(batch, 8))
    if dual_tc and pl.cdiv(batch, tb) < 2 and tb >= 16:
        # Split into two roughly equal large tiles so both TensorCores get work.
        tb = _round_up(pl.cdiv(batch, 2), 8)
    return max(tb, 8)


def flow_based_ratio(theta, x, w1, b1, w2, b2, *, batch_tile=None):
    """FlowBasedRatio.forward(theta, x) -> (B,) log-ratio."""
    B, D = theta.shape
    _, Dx = x.shape
    H = w1.shape[1]

    # Accept 1-D or (1, n) biases from a real checkpoint.
    b1 = jnp.reshape(b1, (1, H))
    b2 = jnp.reshape(b2, (1, 2 * D))

    # Split the head so mu / log_sigma come from separate lane-aligned dots.
    w2_mu, w2_ls = w2[:, :D], w2[:, D:]
    b2_mu, b2_ls = b2[:, :D], b2[:, D:]

    vmem_bytes, dual_tc = _chip_limits()
    tb = batch_tile if batch_tile is not None else _choose_batch_tile(B, vmem_bytes, dual_tc)
    tb = _round_up(min(tb, _round_up(B, 8)), 8)
    n_tiles = pl.cdiv(B, tb)

    # Narrow (<128-lane) f32 blocks pad to 128 lanes in VMEM: ~512 B/row each.
    # theta + x double-buffered plus in-kernel intermediates ~= 8 KiB/row; add headroom,
    # cap at 75% of physical VMEM (64 MiB on v7x, 128 MiB on v5e/v6e).
    vmem_limit = int(min(0.75 * vmem_bytes, max(32 << 20, 8 * 1024 * tb + (4 << 20))))

    resident = lambda i: (0, 0)   # weights: same block every step (fetched once)

    out = pl.pallas_call(
        _ratio_kernel,
        out_shape=jax.ShapeDtypeStruct((n_tiles, 1, tb), jnp.float32),
        grid_spec=pltpu.PrefetchScalarGridSpec(
            num_scalar_prefetch=0,
            grid=(n_tiles,),
            in_specs=[
                pl.BlockSpec((tb, D), lambda i: (i, 0)),      # theta tile (partial last block OK)
                pl.BlockSpec((tb, Dx), lambda i: (i, 0)),     # x tile
                pl.BlockSpec((Dx, H), resident),              # W1
                pl.BlockSpec((1, H), resident),               # b1
                pl.BlockSpec((H, D), resident),               # W2_mu
                pl.BlockSpec((1, D), resident),               # b2_mu
                pl.BlockSpec((H, D), resident),               # W2_ls
                pl.BlockSpec((1, D), resident),               # b2_ls
            ],
            out_specs=pl.BlockSpec((1, 1, tb), lambda i: (i, 0, 0)),   # lane-dense output
        ),
        compiler_params=pltpu.CompilerParams(
            dimension_semantics=("parallel",),
            vmem_limit_bytes=vmem_limit,
        ),
    )(theta, x, w1, b1, w2_mu, b2_mu, w2_ls, b2_ls)
    return out.reshape(n_tiles * tb)[:B]


def _reference(theta, x, w1, b1, w2, b2):
    h = jnp.tanh(x @ w1 + b1)
    params = h @ w2 + b2
    d = theta.shape[-1]
    mu, log_sigma = params[:, :d], params[:, d:]
    log2pi = jnp.log(2.0 * jnp.pi)
    z = (theta - mu) * jnp.exp(-log_sigma)
    log_q = jnp.sum(-0.5 * z * z - log_sigma - 0.5 * log2pi, axis=-1)
    log_p = jnp.sum(-0.5 * theta * theta - 0.5 * log2pi, axis=-1)
    return log_q - log_p


if __name__ == "__main__":
    # Small, module-consistent shapes.
    B, D_THETA, D_X, HIDDEN = 8, 4, 16, 32

    key = jax.random.PRNGKey(0)
    k_theta, k_x, k_w1, k_b1, k_w2, k_b2 = jax.random.split(key, 6)

    theta = jax.random.normal(k_theta, (B, D_THETA), dtype=jnp.float32)
    x = jax.random.normal(k_x, (B, D_X), dtype=jnp.float32)

    # Deterministic synthetic parameters for the npe embedding / head (1-D biases, like nn.Linear).
    w1 = jax.random.normal(k_w1, (D_X, HIDDEN), dtype=jnp.float32) * 0.1
    b1 = jax.random.normal(k_b1, (HIDDEN,), dtype=jnp.float32) * 0.1
    w2 = jax.random.normal(k_w2, (HIDDEN, 2 * D_THETA), dtype=jnp.float32) * 0.1
    b2 = jax.random.normal(k_b2, (2 * D_THETA,), dtype=jnp.float32) * 0.1

    out = jax.block_until_ready(flow_based_ratio(theta, x, w1, b1, w2, b2))
    ref = _reference(theta, x, w1, b1, w2, b2)
    assert out.shape == (B,)
    assert jnp.allclose(out, ref, atol=1e-5, rtol=1e-5), (out, ref)

    # Larger batch that is not a multiple of 8*tile: exercises the un-padded partial final
    # block and the generation-aware tile choice (no wrapper-side jnp.pad copies).
    B2 = 200
    k_t2, k_x2 = jax.random.split(jax.random.PRNGKey(1))
    theta2 = jax.random.normal(k_t2, (B2, D_THETA), dtype=jnp.float32)
    x2 = jax.random.normal(k_x2, (B2, D_X), dtype=jnp.float32)
    ref2 = _reference(theta2, x2, w1, b1, w2, b2)

    out2 = jax.block_until_ready(flow_based_ratio(theta2, x2, w1, b1, w2, b2))
    assert out2.shape == (B2,)
    assert jnp.allclose(out2, ref2, atol=1e-5, rtol=1e-5), (out2, ref2)

    # Forced small tile: multiple grid steps plus a ragged last block (200 = 3*64 + 8).
    out3 = jax.block_until_ready(flow_based_ratio(theta2, x2, w1, b1, w2, b2, batch_tile=64))
    assert out3.shape == (B2,)
    assert jnp.allclose(out3, ref2, atol=1e-5, rtol=1e-5), (out3, ref2)

    print("KERNEL_OK")
</pallas_src>

<mosaic_0001>
module attributes {stable_mosaic.version = 11 : i64} {
  func.func @_ratio_kernel(%arg0: i32, %arg1: memref<8x4xf32, #tpu.memory_space<vmem>>, %arg2: memref<8x16xf32, #tpu.memory_space<vmem>>, %arg3: memref<16x32xf32, #tpu.memory_space<vmem>>, %arg4: memref<1x32xf32, #tpu.memory_space<vmem>>, %arg5: memref<32x4xf32, #tpu.memory_space<vmem>>, %arg6: memref<1x4xf32, #tpu.memory_space<vmem>>, %arg7: memref<32x4xf32, #tpu.memory_space<vmem>>, %arg8: memref<1x4xf32, #tpu.memory_space<vmem>>, %arg9: memref<1x1x8xf32, #tpu.memory_space<vmem>>) attributes {dimension_semantics = [#tpu.dimension_semantics<parallel>], iteration_bounds = array<i64: 1>, scalar_prefetch = 0 : i64, scratch_operands = 0 : i64, tpu.core_type = #tpu.core_type<tc>, window_params = [{transform_indices = @transform_0, window_bounds = array<i64: 8, 4>}, {transform_indices = @transform_1, window_bounds = array<i64: 8, 16>}, {pipeline_mode = #tpu.pipeline_mode<synchronous>, transform_indices = @transform_2, window_bounds = array<i64: 16, 32>}, {pipeline_mode = #tpu.pipeline_mode<synchronous>, transform_indices = @transform_3, window_bounds = array<i64: 1, 32>}, {pipeline_mode = #tpu.pipeline_mode<synchronous>, transform_indices = @transform_4, window_bounds = array<i64: 32, 4>}, {pipeline_mode = #tpu.pipeline_mode<synchronous>, transform_indices = @transform_5, window_bounds = array<i64: 1, 4>}, {pipeline_mode = #tpu.pipeline_mode<synchronous>, transform_indices = @transform_6, window_bounds = array<i64: 32, 4>}, {pipeline_mode = #tpu.pipeline_mode<synchronous>, transform_indices = @transform_7, window_bounds = array<i64: 1, 4>}, {transform_indices = @transform_8, window_bounds = array<i64: 1, 1, 8>}]} {
    %c0 = arith.constant 0 : index
    %c0_0 = arith.constant 0 : index
    %0 = vector.load %arg1[%c0, %c0_0] : memref<8x4xf32, #tpu.memory_space<vmem>>, vector<8x4xf32>
    %c0_1 = arith.constant 0 : index
    %c0_2 = arith.constant 0 : index
    %1 = vector.load %arg2[%c0_1, %c0_2] : memref<8x16xf32, #tpu.memory_space<vmem>>, vector<8x16xf32>
    %c0_3 = arith.constant 0 : index
    %c0_4 = arith.constant 0 : index
    %2 = vector.load %arg3[%c0_3, %c0_4] : memref<16x32xf32, #tpu.memory_space<vmem>>, vector<16x32xf32>
    %cst = arith.constant dense<0.000000e+00> : vector<8x32xf32>
    %3 = tpu.matmul %1, %2, %cst {dimension_numbers = #tpu.dot_dimension_numbers<[1], [0], [0], [1], [0, 0, 1, 1], [], []>} : vector<8x16xf32>, vector<16x32xf32>, vector<8x32xf32> -> vector<8x32xf32>
    %c0_5 = arith.constant 0 : index
    %c0_6 = arith.constant 0 : index
    %4 = vector.load %arg4[%c0_5, %c0_6] : memref<1x32xf32, #tpu.memory_space<vmem>>, vector<1x32xf32>
    %5 = vector.broadcast %4 : vector<1x32xf32> to vector<8x32xf32>
    %6 = arith.addf %3, %5 : vector<8x32xf32>
    %7 = math.tanh %6 : vector<8x32xf32>
    %c0_7 = arith.constant 0 : index
    %c0_8 = arith.constant 0 : index
    %8 = vector.load %arg5[%c0_7, %c0_8] : memref<32x4xf32, #tpu.memory_space<vmem>>, vector<32x4xf32>
    %cst_9 = arith.constant dense<0.000000e+00> : vector<8x4xf32>
    %9 = tpu.matmul %7, %8, %cst_9 {dimension_numbers = #tpu.dot_dimension_numbers<[1], [0], [0], [1], [0, 0, 1, 1], [], []>} : vector<8x32xf32>, vector<32x4xf32>, vector<8x4xf32> -> vector<8x4xf32>
    %c0_10 = arith.constant 0 : index
    %c0_11 = arith.constant 0 : index
    %10 = vector.load %arg6[%c0_10, %c0_11] : memref<1x4xf32, #tpu.memory_space<vmem>>, vector<1x4xf32>
    %11 = vector.broadcast %10 : vector<1x4xf32> to vector<8x4xf32>
    %12 = arith.addf %9, %11 : vector<8x4xf32>
    %c0_12 = arith.constant 0 : index
    %c0_13 = arith.constant 0 : index
    %13 = vector.load %arg7[%c0_12, %c0_13] : memref<32x4xf32, #tpu.memory_space<vmem>>, vector<32x4xf32>
    %cst_14 = arith.constant dense<0.000000e+00> : vector<8x4xf32>
    %14 = tpu.matmul %7, %13, %cst_14 {dimension_numbers = #tpu.dot_dimension_numbers<[1], [0], [0], [1], [0, 0, 1, 1], [], []>} : vector<8x32xf32>, vector<32x4xf32>, vector<8x4xf32> -> vector<8x4xf32>
    %c0_15 = arith.constant 0 : index
    %c0_16 = arith.constant 0 : index
    %15 = vector.load %arg8[%c0_15, %c0_16] : memref<1x4xf32, #tpu.memory_space<vmem>>, vector<1x4xf32>
    %16 = vector.broadcast %15 : vector<1x4xf32> to vector<8x4xf32>
    %17 = arith.addf %14, %16 : vector<8x4xf32>
    %18 = arith.subf %0, %12 : vector<8x4xf32>
    %cst_17 = arith.constant 0.000000e+00 : f32
    %19 = vector.broadcast %cst_17 : f32 to vector<8x4xf32>
    %20 = arith.subf %19, %17 : vector<8x4xf32>
    %21 = math.exp %20 : vector<8x4xf32>
    %22 = arith.mulf %18, %21 : vector<8x4xf32>
    %cst_18 = arith.constant 5.000000e-01 : f32
    %23 = vector.broadcast %cst_18 : f32 to vector<8x4xf32>
    %24 = arith.mulf %23, %0 : vector<8x4xf32>
    %25 = arith.mulf %24, %0 : vector<8x4xf32>
    %cst_19 = arith.constant 5.000000e-01 : f32
    %26 = vector.broadcast %cst_19 : f32 to vector<8x4xf32>
    %27 = arith.mulf %26, %22 : vector<8x4xf32>
    %28 = arith.mulf %27, %22 : vector<8x4xf32>
    %29 = arith.subf %25, %28 : vector<8x4xf32>
    %30 = arith.subf %29, %17 : vector<8x4xf32>
    %cst_20 = arith.constant dense<0.000000e+00> : vector<8xf32>
    %31 = vector.multi_reduction <add>, %30, %cst_20 [1] : vector<8x4xf32> to vector<8xf32>
    %32 = vector.shape_cast %31 : vector<8xf32> to vector<1x1x8xf32>
    %c0_21 = arith.constant 0 : index
    %c0_22 = arith.constant 0 : index
    %c0_23 = arith.constant 0 : index
    %33 = vector.load %arg9[%c0_21, %c0_22, %c0_23] : memref<1x1x8xf32, #tpu.memory_space<vmem>>, vector<1x1x8xf32>
    tpu.vector_store %arg9[%c0_21, %c0_22, %c0_23], %32 {strides = array<i32>} : memref<1x1x8xf32, #tpu.memory_space<vmem>>, vector<1x1x8xf32>,
    return
  }
  func.func @transform_0(%arg0: i32) -> (i32, i32) {
    %c0_i32 = arith.constant 0 : i32
    %c0_i32_0 = arith.constant 0 : i32
    return %arg0, %c0_i32 : i32, i32
  }
  func.func @transform_1(%arg0: i32) -> (i32, i32) {
    %c0_i32 = arith.constant 0 : i32
    %c0_i32_0 = arith.constant 0 : i32
    return %arg0, %c0_i32 : i32, i32
  }
  func.func @transform_2(%arg0: i32) -> (i32, i32) {
    %c0_i32 = arith.constant 0 : i32
    %c0_i32_0 = arith.constant 0 : i32
    %c0_i32_1 = arith.constant 0 : i32
    return %c0_i32, %c0_i32_0 : i32, i32
  }
  func.func @transform_3(%arg0: i32) -> (i32, i32) {
    %c0_i32 = arith.constant 0 : i32
    %c0_i32_0 = arith.constant 0 : i32
    %c0_i32_1 = arith.constant 0 : i32
    return %c0_i32, %c0_i32_0 : i32, i32
  }
  func.func @transform_4(%arg0: i32) -> (i32, i32) {
    %c0_i32 = arith.constant 0 : i32
    %c0_i32_0 = arith.constant 0 : i32
    %c0_i32_1 = arith.constant 0 : i32
    return %c0_i32, %c0_i32_0 : i32, i32
  }
  func.func @transform_5(%arg0: i32) -> (i32, i32) {
    %c0_i32 = arith.constant 0 : i32
    %c0_i32_0 = arith.constant 0 : i32
    %c0_i32_1 = arith.constant 0 : i32
    return %c0_i32, %c0_i32_0 : i32, i32
  }
  func.func @transform_6(%arg0: i32) -> (i32, i32) {
    %c0_i32 = arith.constant 0 : i32
    %c0_i32_0 = arith.constant 0 : i32
    %c0_i32_1 = arith.constant 0 : i32
    return %c0_i32, %c0_i32_0 : i32, i32
  }
  func.func @transform_7(%arg0: i32) -> (i32, i32) {
    %c0_i32 = arith.constant 0 : i32
    %c0_i32_0 = arith.constant 0 : i32
    %c0_i32_1 = arith.constant 0 : i32
    return %c0_i32, %c0_i32_0 : i32, i32
  }
  func.func @transform_8(%arg0: i32) -> (i32, i32, i32) {
    %c0_i32 = arith.constant 0 : i32
    %c0_i32_0 = arith.constant 0 : i32
    %c0_i32_1 = arith.constant 0 : i32
    return %arg0, %c0_i32, %c0_i32_0 : i32, i32, i32
  }
}

</mosaic_0001>

<llo_original>
// kernel: tpu_custom_call.1
$region0: #{tpu_custom_call.1}
  #allocation0 [shape = 'u32[]', space=smem, size = 0x4, offset = 0x4, fixed_abs, tag = 'smem constant byte address 0x4 - core index']
  #allocation1 [shape = 'u32[144,128]{1,0:T(1,128)}', space=vmem, size = 0x12000, scoped, tag = 'internal scratch']
  %s0 = inlined_call_operand.vmem [shape: f32[8,4], index: 0, kind: input, shape index: {}]
  %s1 = inlined_call_operand.vmem [shape: f32[8,16], index: 1, kind: input, shape index: {}]
  %s2 = inlined_call_operand.vmem [shape: f32[16,32], index: 2, kind: input, shape index: {}]
  %s3 = inlined_call_operand.vmem [shape: f32[1,32], index: 3, kind: input, shape index: {}]
  %s4 = inlined_call_operand.vmem [shape: f32[32,4], index: 4, kind: input, shape index: {}]
  %s5 = inlined_call_operand.vmem [shape: f32[1,4], index: 5, kind: input, shape index: {}]
  %s6 = inlined_call_operand.vmem [shape: f32[32,4], index: 6, kind: input, shape index: {}]
  %s7 = inlined_call_operand.vmem [shape: f32[1,4], index: 7, kind: input, shape index: {}]
  %s8 = inlined_call_operand.hbm [shape: f32[1,1,8], index: 8, kind: output, shape index: {}]
  %s9 = sld [smem:[#allocation0]]
  $region42: #{tpu_custom_call.1} parent=0
    _
  %s11 = ssub.s32 1, %s9
  %s12 = scalar_select 0, %s11, %s9
  $region1: #{tpu_custom_call.1} parent=0
    #allocation2 [shape = 'u8[512]{0}', space=vmem, size = 0x400, scoped, tag = 'output window, operand 0, single buffered']
    #allocation3 [shape = 's32[1]{0}', space=sflag, size = 0x4, scoped, tag = 'scoped memory for tpu_custom_call.1']
    %13 = vsyncpa [#allocation3], 0
    // Predicated region
    $region2: #{tpu_custom_call.1} parent=1 // pred_check
      _
    $region3: #{tpu_custom_call.1} parent=1 // pred_check_branch
      %15 = sbr.rel (0) target = $region5
    $region4: #{tpu_custom_call.1} parent=1 // pred_region
      _
    $region5: #{tpu_custom_call.1} parent=1 // pred_fallthru
      _
    // Predicated region
    $region6: #{tpu_custom_call.1} parent=1 // pred_check
      _
    $region7: #{tpu_custom_call.1} parent=1 // pred_check_branch
      %17 = sbr.rel (0) target = $region9
    $region8: #{tpu_custom_call.1} parent=1 // pred_region
      _
    $region9: #{tpu_custom_call.1} parent=1 // pred_fallthru
      _
    // Predicated region
    $region10: #{tpu_custom_call.1} parent=1 // pred_check
      _
    $region11: #{tpu_custom_call.1} parent=1 // pred_check_branch
      %19 = sbr.rel (0) target = $region13
    $region12: #{tpu_custom_call.1} parent=1 // pred_region
      _
    $region13: #{tpu_custom_call.1} parent=1 // pred_fallthru
      _
    // Predicated region
    $region14: #{tpu_custom_call.1} parent=1 // pred_check
      _
    $region15: #{tpu_custom_call.1} parent=1 // pred_check_branch
      %21 = sbr.rel (0) target = $region17
    $region16: #{tpu_custom_call.1} parent=1 // pred_region
      _
    $region17: #{tpu_custom_call.1} parent=1 // pred_fallthru
      _
    // Predicated region
    $region18: #{tpu_custom_call.1} parent=1 // pred_check
      _
    $region19: #{tpu_custom_call.1} parent=1 // pred_check_branch
      %23 = sbr.rel (0) target = $region21
    $region20: #{tpu_custom_call.1} parent=1 // pred_region
      _
    $region21: #{tpu_custom_call.1} parent=1 // pred_fallthru
      _
    // Predicated region
    $region22: #{tpu_custom_call.1} parent=1 // pred_check
      _
    $region23: #{tpu_custom_call.1} parent=1 // pred_check_branch
      %25 = sbr.rel (0) target = $region25
    $region24: #{tpu_custom_call.1} parent=1 // pred_region
      _
    $region25: #{tpu_custom_call.1} parent=1 // pred_fallthru
      _
    // Predicated region
    $region26: #{tpu_custom_call.1} parent=1 // pred_check
      _
    $region27: #{tpu_custom_call.1} parent=1 // pred_check_branch
      %27 = sbr.rel (0) target = $region29
    $region28: #{tpu_custom_call.1} parent=1 // pred_region
      _
    $region29: #{tpu_custom_call.1} parent=1 // pred_fallthru
      _
    // Predicated region
    $region30: #{tpu_custom_call.1} parent=1 // pred_check
      _
    $region31: #{tpu_custom_call.1} parent=1 // pred_check_branch
      %29 = sbr.rel (0) target = $region33
    $region32: #{tpu_custom_call.1} parent=1 // pred_region
      _
    $region33: #{tpu_custom_call.1} parent=1 // pred_fallthru
      _
    %v30 = vld [vmem:[%s0] sm:$0xff]
    %v31 = vld [vmem:[%s1] sm:$0xff]
    %v32 = vld [vmem:[%s2] sm:$0xff]
    %v33 = vld [vmem:[%s2 + $0x8] sm:$0xff]
    %v34 = vld [vmem:[%s3] sm:$0x1]
    %v36 = vlaneseq
    %v37 = vshrl.u32 %v36, 7
    %v38 = vsub.s32 0, %v37
    %v39 = vrot.slane %v34, %v38
    %vm41 = vcmask 130048
    %v43 = vsel %vm41, %v31, 0
    %45 = vmatprep.subr.mxu0 0.0
    %46 = vmatpush1.msra.mxu0 %v32
    %47 = vmatprep.subr.mxu0 0.0
    %48 = vmatpush1.msra.mxu0 %v33
    %49 = vmatprep.subr.mxu0 0.0
    %50 = vmatpush1.msra.mxu0 0.0
    %51 = vmatprep.subr.mxu0 0.0
    %52 = vmatpush1.msra.mxu0 0.0
    %53 = vmatprep.subr.mxu0 0.0
    %54 = vmatpush1.msra.mxu0 0.0
    %55 = vmatprep.subr.mxu0 0.0
    %56 = vmatpush1.msra.mxu0 0.0
    %57 = vmatprep.subr.mxu0 0.0
    %58 = vmatpush1.msra.mxu0 0.0
    %59 = vmatprep.subr.mxu0 0.0
    %60 = vmatpush1.msra.mxu0 0.0
    %61 = vmatprep.subr.mxu0 0.0
    %62 = vmatpush1.msra.mxu0 0.0
    %63 = vmatprep.subr.mxu0 0.0
    %64 = vmatpush1.msra.mxu0 0.0
    %65 = vmatprep.subr.mxu0 0.0
    %66 = vmatpush1.msra.mxu0 0.0
    %67 = vmatprep.subr.mxu0 0.0
    %68 = vmatpush1.msra.mxu0 0.0
    %69 = vmatprep.subr.mxu0 0.0
    %70 = vmatpush1.msra.mxu0 0.0
    %71 = vmatprep.subr.mxu0 0.0
    %72 = vmatpush1.msra.mxu0 0.0
    %73 = vmatprep.subr.mxu0 0.0
    %74 = vmatpush1.msra.mxu0 0.0
    %75 = vmatprep.subr.mxu0 0.0
    %76 = vmatpush1.msra.mxu0 0.0
    %77 = vmatprep.subr.mxu0 0.0
    %78 = vmatpush1.msra.mxu0 0.0
    %79 = vmatprep.subr.mxu0 0.0
    %80 = vmatpush1.msra.mxu0 0.0
    %81 = vmatprep.subr.mxu0 0.0
    %82 = vmatpush1.msra.mxu0 0.0
    %83 = vmatprep.subr.mxu0 0.0
    %84 = vmatpush1.msra.mxu0 0.0
    %85 = vmatprep.subr.mxu0 0.0
    %86 = vmatpush1.msra.mxu0 0.0
    %87 = vmatprep.subr.mxu0 0.0
    %88 = vmatpush1.msra.mxu0 0.0
    %89 = vmatprep.subr.mxu0 0.0
    %90 = vmatpush1.msra.mxu0 0.0
    %91 = vmatprep.subr.mxu0 0.0
    %92 = vmatpush1.msra.mxu0 0.0
    %93 = vmatprep.subr.mxu0 0.0
    %94 = vmatpush1.msra.mxu0 0.0
    %95 = vmatprep.subr.mxu0 0.0
    %96 = vmatpush1.msra.mxu0 0.0
    %97 = vmatprep.subr.mxu0 0.0
    %98 = vmatpush1.msra.mxu0 0.0
    %99 = vmatprep.subr.mxu0 0.0
    %100 = vmatpush1.msra.mxu0 0.0
    %101 = vmatprep.subr.mxu0 0.0
    %102 = vmatpush1.msra.mxu0 0.0
    %103 = vmatprep.subr.mxu0 0.0
    %104 = vmatpush1.msra.mxu0 0.0
    %105 = vmatprep.subr.mxu0 0.0
    %106 = vmatpush1.msra.mxu0 0.0
    %107 = vmatprep.subr.mxu0 0.0
    %108 = vmatpush1.msra.mxu0 0.0
    %109 = vmatprep.mubr.f32.mxu0 0.0
    %110 = vmatmul.mubr.f32.gmra.mrb[0].mxu0 %v43
    %v111 = vpop.f32.mrb[0].mxu0
    %v112 = vadd.f32 %v39, %v111
    %v113 = vpop.f32.mrb[0].mxu0
    %114 = vdwg.mxu0
    %v115 = vtanh.pop %v112
    %v116 = vld [vmem:[%s4] sm:$0xff]
    %v117 = vld [vmem:[%s4 + $0x8] sm:$0xff]
    %v118 = vld [vmem:[%s4 + $0x10] sm:$0xff]
    %v119 = vld [vmem:[%s4 + $0x18] sm:$0xff]
    %v120 = vld [vmem:[%s5] sm:$0x1]
    %v122 = vlaneseq
    %v123 = vshrl.u32 %v122, 7
    %v124 = vsub.s32 0, %v123
    %v125 = vrot.slane %v120, %v124
    %vm127 = vcmask 261120
    %v129 = vsel %vm127, %v115, 0
    %131 = vmatprep.subr.mxu0 0.0
    %132 = vmatpush1.msra.mxu0 %v116
    %133 = vmatprep.subr.mxu0 0.0
    %134 = vmatpush1.msra.mxu0 %v117
    %135 = vmatprep.subr.mxu0 0.0
    %136 = vmatpush1.msra.mxu0 %v118
    %137 = vmatprep.subr.mxu0 0.0
    %138 = vmatpush1.msra.mxu0 %v119
    %139 = vmatprep.subr.mxu0 0.0
    %140 = vmatpush1.msra.mxu0 0.0
    %141 = vmatprep.subr.mxu0 0.0
    %142 = vmatpush1.msra.mxu0 0.0
    %143 = vmatprep.subr.mxu0 0.0
    %144 = vmatpush1.msra.mxu0 0.0
    %145 = vmatprep.subr.mxu0 0.0
    %146 = vmatpush1.msra.mxu0 0.0
    %147 = vmatprep.subr.mxu0 0.0
    %148 = vmatpush1.msra.mxu0 0.0
    %149 = vmatprep.subr.mxu0 0.0
    %150 = vmatpush1.msra.mxu0 0.0
    %151 = vmatprep.subr.mxu0 0.0
    %152 = vmatpush1.msra.mxu0 0.0
    %153 = vmatprep.subr.mxu0 0.0
    %154 = vmatpush1.msra.mxu0 0.0
    %155 = vmatprep.subr.mxu0 0.0
    %156 = vmatpush1.msra.mxu0 0.0
    %157 = vmatprep.subr.mxu0 0.0
    %158 = vmatpush1.msra.mxu0 0.0
    %159 = vmatprep.subr.mxu0 0.0
    %160 = vmatpush1.msra.mxu0 0.0
    %161 = vmatprep.subr.mxu0 0.0
    %162 = vmatpush1.msra.mxu0 0.0
    %163 = vmatprep.subr.mxu0 0.0
    %164 = vmatpush1.msra.mxu0 0.0
    %165 = vmatprep.subr.mxu0 0.0
    %166 = vmatpush1.msra.mxu0 0.0
    %167 = vmatprep.subr.mxu0 0.0
    %168 = vmatpush1.msra.mxu0 0.0
    %169 = vmatprep.subr.mxu0 0.0
    %170 = vmatpush1.msra.mxu0 0.0
    %171 = vmatprep.subr.mxu0 0.0
    %172 = vmatpush1.msra.mxu0 0.0
    %173 = vmatprep.subr.mxu0 0.0
    %174 = vmatpush1.msra.mxu0 0.0
    %175 = vmatprep.subr.mxu0 0.0
    %176 = vmatpush1.msra.mxu0 0.0
    %177 = vmatprep.subr.mxu0 0.0
    %178 = vmatpush1.msra.mxu0 0.0
    %179 = vmatprep.subr.mxu0 0.0
    %180 = vmatpush1.msra.mxu0 0.0
    %181 = vmatprep.subr.mxu0 0.0
    %182 = vmatpush1.msra.mxu0 0.0
    %183 = vmatprep.subr.mxu0 0.0
    %184 = vmatpush1.msra.mxu0 0.0
    %185 = vmatprep.subr.mxu0 0.0
    %186 = vmatpush1.msra.mxu0 0.0
    %187 = vmatprep.subr.mxu0 0.0
    %188 = vmatpush1.msra.mxu0 0.0
    %189 = vmatprep.subr.mxu0 0.0
    %190 = vmatpush1.msra.mxu0 0.0
    %191 = vmatprep.subr.mxu0 0.0
    %192 = vmatpush1.msra.mxu0 0.0
    %193 = vmatprep.subr.mxu0 0.0
    %194 = vmatpush1.msra.mxu0 0.0
    %195 = vmatprep.mubr.f32.mxu0 0.0
    %196 = vmatmul.mubr.f32.gmra.mrb[0].mxu0 %v129
    %v197 = vpop.f32.mrb[0].mxu0
    %v198 = vadd.f32 %v125, %v197
    %v199 = vpop.f32.mrb[0].mxu0
    %200 = vdwg.mxu0
    %v201 = vld [vmem:[%s6] sm:$0xff]
    %v202 = vld [vmem:[%s6 + $0x8] sm:$0xff]
    %v203 = vld [vmem:[%s6 + $0x10] sm:$0xff]
    %v204 = vld [vmem:[%s6 + $0x18] sm:$0xff]
    %v205 = vld [vmem:[%s7] sm:$0x1]
    %v207 = vlaneseq
    %v208 = vshrl.u32 %v207, 7
    %v209 = vsub.s32 0, %v208
    %v210 = vrot.slane %v205, %v209
    %212 = vmatprep.subr.mxu0 0.0
    %213 = vmatpush1.msra.mxu0 %v201
    %214 = vmatprep.subr.mxu0 0.0
    %215 = vmatpush1.msra.mxu0 %v202
    %216 = vmatprep.subr.mxu0 0.0
    %217 = vmatpush1.msra.mxu0 %v203
    %218 = vmatprep.subr.mxu0 0.0
    %219 = vmatpush1.msra.mxu0 %v204
    %220 = vmatprep.subr.mxu0 0.0
    %221 = vmatpush1.msra.mxu0 0.0
    %222 = vmatprep.subr.mxu0 0.0
    %223 = vmatpush1.msra.mxu0 0.0
    %224 = vmatprep.subr.mxu0 0.0
    %225 = vmatpush1.msra.mxu0 0.0
    %226 = vmatprep.subr.mxu0 0.0
    %227 = vmatpush1.msra.mxu0 0.0
    %228 = vmatprep.subr.mxu0 0.0
    %229 = vmatpush1.msra.mxu0 0.0
    %230 = vmatprep.subr.mxu0 0.0
    %231 = vmatpush1.msra.mxu0 0.0
    %232 = vmatprep.subr.mxu0 0.0
    %233 = vmatpush1.msra.mxu0 0.0
    %234 = vmatprep.subr.mxu0 0.0
    %235 = vmatpush1.msra.mxu0 0.0
    %236 = vmatprep.subr.mxu0 0.0
    %237 = vmatpush1.msra.mxu0 0.0
    %238 = vmatprep.subr.mxu0 0.0
    %239 = vmatpush1.msra.mxu0 0.0
    %240 = vmatprep.subr.mxu0 0.0
    %241 = vmatpush1.msra.mxu0 0.0
    %242 = vmatprep.subr.mxu0 0.0
    %243 = vmatpush1.msra.mxu0 0.0
    %244 = vmatprep.subr.mxu0 0.0
    %245 = vmatpush1.msra.mxu0 0.0
    %246 = vmatprep.subr.mxu0 0.0
    %247 = vmatpush1.msra.mxu0 0.0
    %248 = vmatprep.subr.mxu0 0.0
    %249 = vmatpush1.msra.mxu0 0.0
    %250 = vmatprep.subr.mxu0 0.0
    %251 = vmatpush1.msra.mxu0 0.0
    %252 = vmatprep.subr.mxu0 0.0
    %253 = vmatpush1.msra.mxu0 0.0
    %254 = vmatprep.subr.mxu0 0.0
    %255 = vmatpush1.msra.mxu0 0.0
    %256 = vmatprep.subr.mxu0 0.0
    %257 = vmatpush1.msra.mxu0 0.0
    %258 = vmatprep.subr.mxu0 0.0
    %259 = vmatpush1.msra.mxu0 0.0
    %260 = vmatprep.subr.mxu0 0.0
    %261 = vmatpush1.msra.mxu0 0.0
    %262 = vmatprep.subr.mxu0 0.0
    %263 = vmatpush1.msra.mxu0 0.0
    %264 = vmatprep.subr.mxu0 0.0
    %265 = vmatpush1.msra.mxu0 0.0
    %266 = vmatprep.subr.mxu0 0.0
    %267 = vmatpush1.msra.mxu0 0.0
    %268 = vmatprep.subr.mxu0 0.0
    %269 = vmatpush1.msra.mxu0 0.0
    %270 = vmatprep.subr.mxu0 0.0
    %271 = vmatpush1.msra.mxu0 0.0
    %272 = vmatprep.subr.mxu0 0.0
    %273 = vmatpush1.msra.mxu0 0.0
    %274 = vmatprep.subr.mxu0 0.0
    %275 = vmatpush1.msra.mxu0 0.0
    %276 = vmatprep.mubr.f32.mxu0 0.0
    %277 = vmatmul.mubr.f32.gmra.mrb[0].mxu0 %v129
    %v278 = vpop.f32.mrb[0].mxu0
    %v279 = vadd.f32 %v210, %v278
    %v280 = vpop.f32.mrb[0].mxu0
    %281 = vdwg.mxu0
    %v282 = vsub.f32 %v30, %v198
    %v283 = vsub.f32 0.0, %v279
    %v284 = vmul.f32 %v283, 1.442695
    %v285 = vpow.pop %v284
    %v286 = vmul.f32 %v282, %v285
    %v287 = vmul.f32 %v30, 0.5
    %v288 = vmul.f32 %v287, %v30
    %v289 = vmul.f32 %v286, 0.5
    %v290 = vmul.f32 %v289, %v286
    %v291 = vsub.f32 %v288, %v290
    %v292 = vsub.f32 %v291, %v279
    %vm293 = vcmask 31744
    %v294 = vsel %vm293, %v292, 0.0
    %295 = vadd.xlane.f32.xlu0 %v294
    %v296 = vpop.xlane.xlu0 %295
    %v298 = vlaneseq
    %v299 = vand.u32 %v298, 127
    %v300 = vlaneseq
    %v301 = vshrl.u32 %v300, 7
    %v302 = vsub.s32 %v299, %v301
    %v303 = vrot.slane %v296, %v302
    %vm305 = vcmask 57344
    %306 = vst.msk [vmem:[#allocation2] sm:$0x1] %vm305, %v303
    // Predicated region
    $region34: #{tpu_custom_call.1} parent=1 // pred_check
      _
    $region35: #{tpu_custom_call.1} parent=1 // pred_check_branch
      %308 = sbr.rel (0) target = $region37
    $region36: #{tpu_custom_call.1} parent=1 // pred_region
      %s310 = ssub.s32 16, 16
      %311 = vsyncadd [#allocation3], %s310
      %s313 = sshll.u32 [#allocation2], 4
      %s314 = int_to_ptr.vmem [resolvable:$true] %s313
      %316 = dma.vmem_to_hbm [thread:$0]  %s314, 16, %s8, [#allocation3]
    $region37: #{tpu_custom_call.1} parent=1 // pred_fallthru
      _
    // Predicated region
    $region38: #{tpu_custom_call.1} parent=1 // pred_check
      _
    $region39: #{tpu_custom_call.1} parent=1 // pred_check_branch
      %318 = sbr.rel (0) target = $region41
    $region40: #{tpu_custom_call.1} parent=1 // pred_region
      %319 = dma.done [#allocation3], 16
    $region41: #{tpu_custom_call.1} parent=1 // pred_fallthru
      _
    %320 = vsyncpa [#allocation3], 1

</llo_original>
